<compile_context>
chip_gen: v7x
topology: tpu7x:2x2x1
jax: 0.10.0
libtpu: 0.0.40
codegen_flags: <defaults>
</compile_context>

<pallas_src>
import jax
import jax.numpy as jnp
from jax.experimental import pallas as pl
from jax.experimental.pallas import tpu as pltpu

_TARGET_TILE_BYTES = 4 * 1024 * 1024   # ~4 MiB per buffer (per perf review)
_VMEM_LIMIT_BYTES = 32 * 1024 * 1024   # 4 bufs x 4 MiB = 16 MiB + headroom
_SMALL_INPUT_BYTES = 1 * 1024 * 1024   # below this, pallas_call overhead wins


def _ptmodule_kernel(x_ref, o_ref):
    x = x_ref[...]
    y = (x + 10.0) * 2.0
    o_ref[...] = y * y          # torch.pow(., 2)


def _reference(x):
    y = (x + 10.0) * 2.0
    return y * y


def _pick_lanes(total: int) -> int:
    """Largest lane-dense width (multiple of 128) that divides `total`."""
    for lanes in (2048, 1024, 512, 256, 128):
        if total % lanes == 0:
            return lanes
    return 0


def _choose_tile_rows(rows: int, lanes: int, itemsize: int) -> int:
    sublane = max(8, 32 // itemsize)          # 8 for f32, 16 for bf16, 32 for i8
    if rows <= sublane:
        return rows                           # single block == full array dims (legal)
    # ~4 MiB per buffer, rounded to the sublane granularity.
    target = max(sublane,
                 (_TARGET_TILE_BYTES // (lanes * itemsize)) // sublane * sublane)
    # Guarantee >= 2 grid blocks so v7x can shard DMA across both TensorCores.
    half = max(sublane, ((rows + 1) // 2) // sublane * sublane)
    return min(target, half)


def ptmodule_forward(x, *, force_pallas: bool = False):
    """x: any-shape float tensor -> same shape, ((x + 10) * 2) ** 2."""
    orig_shape = x.shape
    total = x.size
    itemsize = x.dtype.itemsize

    # Tiny inputs: XLA's fused elementwise op beats pallas_call fixed overhead.
    if not force_pallas and total * itemsize < _SMALL_INPUT_BYTES:
        return _reference(x)

    lanes = _pick_lanes(total)
    if lanes == 0:
        # Element count not a multiple of 128: a lane-dense repack would need a
        # whole-tensor pad + slice (≈2x HBM traffic).  The op is trivially
        # fused by XLA at the HBM roofline, so just do it in plain JAX.
        return _reference(x)

    rows = total // lanes
    tile_rows = _choose_tile_rows(rows, lanes, itemsize)
    grid = pl.cdiv(rows, tile_rows)           # last block may overhang; writes
                                              # past `rows` are dropped (safe:
                                              # purely elementwise op).

    x2d = x.reshape(rows, lanes)              # free view: lanes divides total

    out2d = pl.pallas_call(
        _ptmodule_kernel,
        out_shape=jax.ShapeDtypeStruct((rows, lanes), x.dtype),
        grid=(grid,),
        in_specs=[pl.BlockSpec((tile_rows, lanes), lambda i: (i, 0))],
        out_specs=pl.BlockSpec((tile_rows, lanes), lambda i: (i, 0)),
        input_output_aliases={0: 0},          # donate input HBM buffer
        compiler_params=pltpu.CompilerParams(
            dimension_semantics=("parallel",),
            vmem_limit_bytes=_VMEM_LIMIT_BYTES,
        ),
        cost_estimate=pl.CostEstimate(
            flops=3 * total,
            transcendentals=0,
            bytes_accessed=2 * total * itemsize,
        ),
    )(x2d)

    return out2d.reshape(orig_shape)


if __name__ == "__main__":
    key = jax.random.PRNGKey(0)
    x = jax.random.normal(key, (2, 4, 16, 16), dtype=jnp.float32)

    # Force the Pallas path so the kernel itself is exercised at this small size.
    y = ptmodule_forward(x, force_pallas=True)
    jax.block_until_ready(y)

    y_ref = _reference(x)
    assert y.shape == x.shape and y.dtype == x.dtype
    assert jnp.allclose(y, y_ref, rtol=1e-6, atol=1e-6)

    # Default path (small-input JAX fast path) must agree as well.
    y_fast = ptmodule_forward(x)
    jax.block_until_ready(y_fast)
    assert jnp.allclose(y_fast, y_ref, rtol=1e-6, atol=1e-6)

    print("KERNEL_OK")
</pallas_src>

<mosaic_0001>
module attributes {stable_mosaic.version = 11 : i64} {
  func.func @_ptmodule_kernel(%arg0: i32, %arg1: memref<1x2048xf32, #tpu.memory_space<vmem>>, %arg2: memref<1x2048xf32, #tpu.memory_space<vmem>>) attributes {dimension_semantics = [#tpu.dimension_semantics<parallel>], iteration_bounds = array<i64: 1>, scalar_prefetch = 0 : i64, scratch_operands = 0 : i64, tpu.core_type = #tpu.core_type<tc>, window_params = [{transform_indices = @transform_0, window_bounds = array<i64: 1, 2048>}, {transform_indices = @transform_1, window_bounds = array<i64: 1, 2048>}]} {
    %c0 = arith.constant 0 : index
    %c0_0 = arith.constant 0 : index
    %0 = vector.load %arg1[%c0, %c0_0] : memref<1x2048xf32, #tpu.memory_space<vmem>>, vector<1x2048xf32>
    %cst = arith.constant 1.000000e+01 : f32
    %1 = vector.broadcast %cst : f32 to vector<1x2048xf32>
    %2 = arith.addf %0, %1 : vector<1x2048xf32>
    %cst_1 = arith.constant 2.000000e+00 : f32
    %3 = vector.broadcast %cst_1 : f32 to vector<1x2048xf32>
    %4 = arith.mulf %2, %3 : vector<1x2048xf32>
    %5 = arith.mulf %4, %4 : vector<1x2048xf32>
    %c0_2 = arith.constant 0 : index
    %c0_3 = arith.constant 0 : index
    %6 = vector.load %arg2[%c0_2, %c0_3] : memref<1x2048xf32, #tpu.memory_space<vmem>>, vector<1x2048xf32>
    tpu.vector_store %arg2[%c0_2, %c0_3], %5 {strides = array<i32>} : memref<1x2048xf32, #tpu.memory_space<vmem>>, vector<1x2048xf32>,
    return
  }
  func.func @transform_0(%arg0: i32) -> (i32, i32) {
    %c0_i32 = arith.constant 0 : i32
    %c0_i32_0 = arith.constant 0 : i32
    return %arg0, %c0_i32 : i32, i32
  }
  func.func @transform_1(%arg0: i32) -> (i32, i32) {
    %c0_i32 = arith.constant 0 : i32
    %c0_i32_0 = arith.constant 0 : i32
    return %arg0, %c0_i32 : i32, i32
  }
}

</mosaic_0001>

<llo_original>
// kernel: tpu_custom_call.1
$region0: #{tpu_custom_call.1}
  #allocation0 [shape = 'u32[]', space=smem, size = 0x4, offset = 0x4, fixed_abs, tag = 'smem constant byte address 0x4 - core index']
  #allocation1 [shape = 'u32[144,128]{1,0:T(1,128)}', space=vmem, size = 0x12000, scoped, tag = 'internal scratch']
  %s0 = inlined_call_operand.hbm [shape: f32[1,2048], index: 0, kind: input, shape index: {}, may-alias: {0,1}]
  %s1 = inlined_call_operand.hbm [shape: f32[1,2048], index: 1, kind: output, shape index: {}, may-alias: {0,1}]
  %s2 = sld [smem:[#allocation0]]
  $region18: #{tpu_custom_call.1} parent=0
    _
  %s4 = ssub.s32 1, %s2
  %s5 = scalar_select 0, %s4, %s2
  $region1: #{tpu_custom_call.1} parent=0
    #allocation2 [shape = 'u8[8192]{0}', space=vmem, size = 0x2000, scoped, tag = 'input window, operand 0, single buffered']
    #allocation3 [shape = 's32[1]{0}', space=sflag, size = 0x4, scoped, tag = 'scoped memory for tpu_custom_call.1']
    #allocation4 [shape = 's32[1]{0}', space=sflag, size = 0x4, scoped, tag = 'scoped memory for tpu_custom_call.1']
    #allocation5 [shape = 'u8[8192]{0}', space=vmem, size = 0x2000, scoped, tag = 'output window, operand 0, single buffered']
    %6 = vsyncpa [#allocation3], 0
    %7 = vsyncpa [#allocation4], 0
    // Predicated region
    $region2: #{tpu_custom_call.1} parent=1 // pred_check
      _
    $region3: #{tpu_custom_call.1} parent=1 // pred_check_branch
      %9 = sbr.rel (0) target = $region5
    $region4: #{tpu_custom_call.1} parent=1 // pred_region
      %s11 = ssub.s32 256, 256
      %12 = vsyncadd [#allocation3], %s11
      %s14 = sshll.u32 [#allocation2], 4
      %s15 = int_to_ptr.vmem [resolvable:$true] %s14
      %17 = dma.hbm_to_vmem [thread:$0]  %s0, 256, %s15, [#allocation3]
    $region5: #{tpu_custom_call.1} parent=1 // pred_fallthru
      _
    // Predicated region
    $region6: #{tpu_custom_call.1} parent=1 // pred_check
      _
    $region7: #{tpu_custom_call.1} parent=1 // pred_check_branch
      %19 = sbr.rel (0) target = $region9
    $region8: #{tpu_custom_call.1} parent=1 // pred_region
      %20 = dma.done [#allocation3], 256
    $region9: #{tpu_custom_call.1} parent=1 // pred_fallthru
      _
    %v21 = vld [vmem:[#allocation2] sm:$0xff]
    %v22 = vld [vmem:[#allocation2 + $0x8] sm:$0xff]
    %v23 = vadd.f32 %v21, 10.0
    %v24 = vadd.f32 %v22, 10.0
    %v25 = vmul.f32 %v23, 2.0
    %v26 = vmul.f32 %v24, 2.0
    %v27 = vmul.f32 %v25, %v25
    %v28 = vmul.f32 %v26, %v26
    %29 = vst [vmem:[#allocation5] sm:$0xff] %v27
    %30 = vst [vmem:[#allocation5 + $0x8] sm:$0xff] %v28
    // Predicated region
    $region10: #{tpu_custom_call.1} parent=1 // pred_check
      _
    $region11: #{tpu_custom_call.1} parent=1 // pred_check_branch
      %32 = sbr.rel (0) target = $region13
    $region12: #{tpu_custom_call.1} parent=1 // pred_region
      %s34 = ssub.s32 256, 256
      %35 = vsyncadd [#allocation4], %s34
      %s37 = sshll.u32 [#allocation5], 4
      %s38 = int_to_ptr.vmem [resolvable:$true] %s37
      %40 = dma.vmem_to_hbm [thread:$0]  %s38, 256, %s1, [#allocation4]
    $region13: #{tpu_custom_call.1} parent=1 // pred_fallthru
      _
    // Predicated region
    $region14: #{tpu_custom_call.1} parent=1 // pred_check
      _
    $region15: #{tpu_custom_call.1} parent=1 // pred_check_branch
      %42 = sbr.rel (0) target = $region17
    $region16: #{tpu_custom_call.1} parent=1 // pred_region
      %43 = dma.done [#allocation4], 256
    $region17: #{tpu_custom_call.1} parent=1 // pred_fallthru
      _
    %44 = vsyncpa [#allocation3], 1
    %45 = vsyncpa [#allocation4], 1

</llo_original>
